<compile_context>
chip_gen: v5e
topology: v5e:2x2
jax: 0.10.0
libtpu: 0.0.40
codegen_flags: <defaults>
</compile_context>

<pallas_src>
import functools

import jax
import jax.numpy as jnp
from jax.experimental import pallas as pl
from jax.experimental.pallas import tpu as pltpu


def _round_up(n: int, m: int) -> int:
    return ((n + m - 1) // m) * m


def _elman_chunk_kernel(x_ref, xprev_ref, ctx0_ref, w1_ref, w2_ref, w3_ref,
                        b1_ref, b2_ref, out_ref, ctx_out_ref):
    """Computes TB independent Elman steps per grid point (no carried state)."""
    TB, B_PAD, IN_PAD = x_ref.shape
    H_PAD = w1_ref.shape[1]
    OUT_PAD = w2_ref.shape[1]
    out_dim = out_ref.shape[2]      # real (unpadded) output feature width
    h_real = ctx_out_ref.shape[2]   # real (unpadded) hidden width

    # Flatten (time, batch) into one MXU-filling M dimension (free reshape:
    # trailing (8,128)-aligned tiles, leading dims merged).
    xf = x_ref[...].reshape(TB * B_PAD, IN_PAD)
    xpf = xprev_ref[...].reshape(TB * B_PAD, IN_PAD)

    w1 = w1_ref[...]
    b1 = b1_ref[...]

    pre = jnp.dot(xf, w1, preferred_element_type=jnp.float32) + b1
    pre_prev = jnp.dot(xpf, w1, preferred_element_type=jnp.float32) + b1

    new_ctx = jax.nn.sigmoid(pre)        # context_state produced by step t
    ctx_used = jax.nn.sigmoid(pre_prev)  # context_state consumed by step t

    # Step 0 of the whole sequence consumes the caller-provided ctx0 instead
    # of sigmoid(x[-1] @ w1 + b1).  One cheap VPU select per chunk.
    ctx3 = ctx_used.reshape(TB, B_PAD, H_PAD)
    t_idx = jax.lax.broadcasted_iota(jnp.int32, (TB, B_PAD, H_PAD), 0)
    sel = (pl.program_id(0) == 0) & (t_idx == 0)
    ctx0_b = jnp.broadcast_to(ctx0_ref[...][None, :, :], (TB, B_PAD, H_PAD))
    ctx_used = jnp.where(sel, ctx0_b, ctx3).reshape(TB * B_PAD, H_PAD)

    hidden_act = jnp.tanh(
        pre + jnp.dot(ctx_used, w3_ref[...], preferred_element_type=jnp.float32))
    out = jax.nn.sigmoid(
        jnp.dot(hidden_act, w2_ref[...], preferred_element_type=jnp.float32)
        + b2_ref[...])

    # Store only the real feature lanes (not the 128-lane padding) to cut
    # HBM writeback.
    out_ref[...] = out.reshape(TB, B_PAD, OUT_PAD)[:, :, :out_dim]
    ctx_out_ref[...] = new_ctx.reshape(TB, B_PAD, H_PAD)[:, :, :h_real]


@functools.partial(jax.jit, static_argnames=("time_block",))
def elman_sequence_forward(x_seq, ctx0, w1, w2, w3, b1, b2, *, time_block=128):
    """Run T Elman steps in ONE pallas_call, fully parallel over time.

    x_seq: (T, B, in_dim)      per-step inputs
    ctx0:  (B, hidden)         initial context state
    Returns (outs, ctxs) with outs: (T, B, out_dim), ctxs: (T, B, hidden);
    ctxs[t] is the context_state produced by step t (ctxs[-1] is the carry).
    """
    T, B, in_dim = x_seq.shape
    hidden = w1.shape[1]
    out_dim = w2.shape[1]

    # Lane/sublane-dense padded sizes for the matmul operands (zero padding is
    # numerically inert because padded weight rows/cols are zero).
    B_PAD = _round_up(max(B, 8), 8)
    IN_PAD = _round_up(max(in_dim, 128), 128)
    H_PAD = _round_up(max(hidden, 128), 128)
    OUT_PAD = _round_up(max(out_dim, 128), 128)

    TB = min(int(time_block), T)        # timesteps per grid step (chunk)
    T_PAD = _round_up(T, TB)
    n_chunks = T_PAD // TB

    f32 = jnp.float32
    xp = jnp.zeros((T_PAD, B_PAD, IN_PAD), f32).at[:T, :B, :in_dim].set(
        x_seq.astype(f32))
    # Globally time-shifted input: xprev[t] = x[t-1]; xprev[0] is a dummy that
    # the kernel overrides with ctx0.
    xprev = jnp.zeros_like(xp).at[1:].set(xp[:-1])

    cp = jnp.zeros((B_PAD, H_PAD), f32).at[:B, :hidden].set(ctx0.astype(f32))
    w1p = jnp.zeros((IN_PAD, H_PAD), f32).at[:in_dim, :hidden].set(
        w1.astype(f32))
    w2p = jnp.zeros((H_PAD, OUT_PAD), f32).at[:hidden, :out_dim].set(
        w2.astype(f32))
    w3p = jnp.zeros((H_PAD, H_PAD), f32).at[:hidden, :hidden].set(
        w3.astype(f32))
    b1p = jnp.zeros((1, H_PAD), f32).at[:, :hidden].set(b1.astype(f32))
    b2p = jnp.zeros((1, OUT_PAD), f32).at[:, :out_dim].set(b2.astype(f32))

    grid_spec = pltpu.PrefetchScalarGridSpec(
        num_scalar_prefetch=0,
        grid=(n_chunks,),
        in_specs=[
            # per-chunk inputs: new block each chunk (auto double-buffered)
            pl.BlockSpec((TB, B_PAD, IN_PAD), lambda c: (c, 0, 0)),
            pl.BlockSpec((TB, B_PAD, IN_PAD), lambda c: (c, 0, 0)),
            # ctx0 + weights/biases: constant block index -> VMEM-resident
            pl.BlockSpec((B_PAD, H_PAD), lambda c: (0, 0)),
            pl.BlockSpec((IN_PAD, H_PAD), lambda c: (0, 0)),
            pl.BlockSpec((H_PAD, OUT_PAD), lambda c: (0, 0)),
            pl.BlockSpec((H_PAD, H_PAD), lambda c: (0, 0)),
            pl.BlockSpec((1, H_PAD), lambda c: (0, 0)),
            pl.BlockSpec((1, OUT_PAD), lambda c: (0, 0)),
        ],
        out_specs=[
            # feature dims unpadded -> write only real bytes per chunk
            pl.BlockSpec((TB, B_PAD, out_dim), lambda c: (c, 0, 0)),
            pl.BlockSpec((TB, B_PAD, hidden), lambda c: (c, 0, 0)),
        ],
    )

    outs_p, ctxs_p = pl.pallas_call(
        _elman_chunk_kernel,
        out_shape=(
            jax.ShapeDtypeStruct((T_PAD, B_PAD, out_dim), jnp.float32),
            jax.ShapeDtypeStruct((T_PAD, B_PAD, hidden), jnp.float32),
        ),
        grid_spec=grid_spec,
        compiler_params=pltpu.CompilerParams(
            # Chunks are independent (no carried state) -> parallel; on v7x
            # this shards the time axis across both TensorCores.
            dimension_semantics=("parallel",)),
    )(xp, xprev, cp, w1p, w2p, w3p, b1p, b2p)

    outs = outs_p[:T, :B, :]
    ctxs = ctxs_p[:T, :B, :]
    return outs, ctxs


def elman_forward(input_, context_state, w1, w2, w3, b1, b2):
    """Single-step forward matching Elman.forward (T=1 special case)."""
    outs, ctxs = elman_sequence_forward(input_[None], context_state,
                                        w1, w2, w3, b1, b2)
    return outs[0], ctxs[0]


def _reference_step(x, ctx, w1, w2, w3, b1, b2):
    pre = x @ w1 + b1
    hidden = jnp.tanh(pre + ctx @ w3)
    out = jax.nn.sigmoid(hidden @ w2 + b2)
    new_ctx = jax.nn.sigmoid(pre)
    return out, new_ctx


def _reference_sequence(x_seq, ctx0, w1, w2, w3, b1, b2):
    ctx = ctx0
    outs, ctxs = [], []
    for t in range(x_seq.shape[0]):
        out, ctx = _reference_step(x_seq[t], ctx, w1, w2, w3, b1, b2)
        outs.append(out)
        ctxs.append(ctx)
    return jnp.stack(outs), jnp.stack(ctxs)


if __name__ == "__main__":
    # Small shapes consistent with Elman usage: sequence of per-step inputs,
    # hidden_size=32, scalar output per step.
    T, B, in_dim, hidden, out_dim = 8, 2, 8, 32, 1

    key = jax.random.PRNGKey(0)
    k_x, k_w1, k_w2, k_w3, k_b1, k_b2 = jax.random.split(key, 6)

    x_seq = jax.random.normal(k_x, (T, B, in_dim), dtype=jnp.float32)
    ctx0 = jnp.zeros((B, hidden), dtype=jnp.float32)  # as in Elman.train

    w1 = jax.random.normal(k_w1, (in_dim, hidden), dtype=jnp.float32) * 0.1
    w2 = jax.random.normal(k_w2, (hidden, out_dim), dtype=jnp.float32) * 0.1
    w3 = jax.random.normal(k_w3, (hidden, hidden), dtype=jnp.float32) * 0.1
    b1 = jax.random.normal(k_b1, (1, hidden), dtype=jnp.float32) * 0.1
    b2 = jax.random.normal(k_b2, (1, out_dim), dtype=jnp.float32) * 0.1

    # Full-sequence fused kernel (one pallas_call, parallel over time chunks).
    outs, ctxs = elman_sequence_forward(x_seq, ctx0, w1, w2, w3, b1, b2)
    outs = jax.block_until_ready(outs)
    ctxs = jax.block_until_ready(ctxs)

    ref_outs, ref_ctxs = _reference_sequence(x_seq, ctx0, w1, w2, w3, b1, b2)
    assert outs.shape == (T, B, out_dim) and ctxs.shape == (T, B, hidden)
    assert jnp.allclose(outs, ref_outs, atol=1e-5, rtol=1e-5)
    assert jnp.allclose(ctxs, ref_ctxs, atol=1e-5, rtol=1e-5)

    # Single-step API (matches Elman.forward signature/semantics exactly).
    out1, ctx1 = elman_forward(x_seq[0], ctx0, w1, w2, w3, b1, b2)
    out1 = jax.block_until_ready(out1)
    ref_out1, ref_ctx1 = _reference_step(x_seq[0], ctx0, w1, w2, w3, b1, b2)
    assert jnp.allclose(out1, ref_out1, atol=1e-5, rtol=1e-5)
    assert jnp.allclose(ctx1, ref_ctx1, atol=1e-5, rtol=1e-5)

    print("KERNEL_OK")
</pallas_src>

<mosaic_0001>
module attributes {stable_mosaic.version = 11 : i64} {
  func.func @_elman_chunk_kernel(%arg0: i32, %arg1: memref<8x8x128xf32, #tpu.memory_space<vmem>>, %arg2: memref<8x8x128xf32, #tpu.memory_space<vmem>>, %arg3: memref<8x128xf32, #tpu.memory_space<vmem>>, %arg4: memref<128x128xf32, #tpu.memory_space<vmem>>, %arg5: memref<128x128xf32, #tpu.memory_space<vmem>>, %arg6: memref<128x128xf32, #tpu.memory_space<vmem>>, %arg7: memref<1x128xf32, #tpu.memory_space<vmem>>, %arg8: memref<1x128xf32, #tpu.memory_space<vmem>>, %arg9: memref<8x8x1xf32, #tpu.memory_space<vmem>>, %arg10: memref<8x8x32xf32, #tpu.memory_space<vmem>>) attributes {dimension_semantics = [#tpu.dimension_semantics<parallel>], iteration_bounds = array<i64: 1>, scalar_prefetch = 0 : i64, scratch_operands = 0 : i64, tpu.core_type = #tpu.core_type<tc>, window_params = [{transform_indices = @transform_0, window_bounds = array<i64: 8, 8, 128>}, {transform_indices = @transform_1, window_bounds = array<i64: 8, 8, 128>}, {pipeline_mode = #tpu.pipeline_mode<synchronous>, transform_indices = @transform_2, window_bounds = array<i64: 8, 128>}, {pipeline_mode = #tpu.pipeline_mode<synchronous>, transform_indices = @transform_3, window_bounds = array<i64: 128, 128>}, {pipeline_mode = #tpu.pipeline_mode<synchronous>, transform_indices = @transform_4, window_bounds = array<i64: 128, 128>}, {pipeline_mode = #tpu.pipeline_mode<synchronous>, transform_indices = @transform_5, window_bounds = array<i64: 128, 128>}, {pipeline_mode = #tpu.pipeline_mode<synchronous>, transform_indices = @transform_6, window_bounds = array<i64: 1, 128>}, {pipeline_mode = #tpu.pipeline_mode<synchronous>, transform_indices = @transform_7, window_bounds = array<i64: 1, 128>}, {transform_indices = @transform_8, window_bounds = array<i64: 8, 8, 1>}, {transform_indices = @transform_9, window_bounds = array<i64: 8, 8, 32>}]} {
    %c0 = arith.constant 0 : index
    %c0_0 = arith.constant 0 : index
    %c0_1 = arith.constant 0 : index
    %0 = vector.load %arg1[%c0, %c0_0, %c0_1] : memref<8x8x128xf32, #tpu.memory_space<vmem>>, vector<8x8x128xf32>
    %1 = vector.shape_cast %0 : vector<8x8x128xf32> to vector<64x128xf32>
    %c0_2 = arith.constant 0 : index
    %c0_3 = arith.constant 0 : index
    %c0_4 = arith.constant 0 : index
    %2 = vector.load %arg2[%c0_2, %c0_3, %c0_4] : memref<8x8x128xf32, #tpu.memory_space<vmem>>, vector<8x8x128xf32>
    %3 = vector.shape_cast %2 : vector<8x8x128xf32> to vector<64x128xf32>
    %c0_5 = arith.constant 0 : index
    %c0_6 = arith.constant 0 : index
    %4 = vector.load %arg4[%c0_5, %c0_6] : memref<128x128xf32, #tpu.memory_space<vmem>>, vector<128x128xf32>
    %c0_7 = arith.constant 0 : index
    %c0_8 = arith.constant 0 : index
    %5 = vector.load %arg7[%c0_7, %c0_8] : memref<1x128xf32, #tpu.memory_space<vmem>>, vector<1x128xf32>
    %cst = arith.constant dense<0.000000e+00> : vector<64x128xf32>
    %6 = tpu.matmul %1, %4, %cst {dimension_numbers = #tpu.dot_dimension_numbers<[1], [0], [0], [1], [0, 0, 1, 1], [], []>} : vector<64x128xf32>, vector<128x128xf32>, vector<64x128xf32> -> vector<64x128xf32>
    %7 = vector.broadcast %5 : vector<1x128xf32> to vector<64x128xf32>
    %8 = arith.addf %6, %7 : vector<64x128xf32>
    %cst_9 = arith.constant dense<0.000000e+00> : vector<64x128xf32>
    %9 = tpu.matmul %3, %4, %cst_9 {dimension_numbers = #tpu.dot_dimension_numbers<[1], [0], [0], [1], [0, 0, 1, 1], [], []>} : vector<64x128xf32>, vector<128x128xf32>, vector<64x128xf32> -> vector<64x128xf32>
    %10 = vector.broadcast %5 : vector<1x128xf32> to vector<64x128xf32>
    %11 = arith.addf %9, %10 : vector<64x128xf32>
    %12 = arith.negf %8 : vector<64x128xf32>
    %13 = math.exp %12 : vector<64x128xf32>
    %cst_10 = arith.constant 1.000000e+00 : f32
    %14 = vector.broadcast %cst_10 : f32 to vector<64x128xf32>
    %15 = arith.addf %14, %13 : vector<64x128xf32>
    %16 = arith.divf %14, %15 : vector<64x128xf32>
    %17 = arith.negf %11 : vector<64x128xf32>
    %18 = math.exp %17 : vector<64x128xf32>
    %cst_11 = arith.constant 1.000000e+00 : f32
    %19 = vector.broadcast %cst_11 : f32 to vector<64x128xf32>
    %20 = arith.addf %19, %18 : vector<64x128xf32>
    %21 = arith.divf %19, %20 : vector<64x128xf32>
    %22 = vector.shape_cast %21 : vector<64x128xf32> to vector<8x8x128xf32>
    %23 = tpu.iota {dimensions = array<i32: 0>} : vector<8x8x128xi32>
    %c0_i32 = arith.constant 0 : i32
    %24 = arith.cmpi eq, %arg0, %c0_i32 : i32
    %c0_i32_12 = arith.constant 0 : i32
    %25 = vector.broadcast %c0_i32_12 : i32 to vector<8x8x128xi32>
    %26 = arith.cmpi eq, %23, %25 : vector<8x8x128xi32>
    %27 = vector.broadcast %24 : i1 to vector<8x8x128xi1>
    %28 = arith.andi %27, %26 : vector<8x8x128xi1>
    %c0_13 = arith.constant 0 : index
    %c0_14 = arith.constant 0 : index
    %29 = vector.load %arg3[%c0_13, %c0_14] : memref<8x128xf32, #tpu.memory_space<vmem>>, vector<8x128xf32>
    %30 = vector.shape_cast %29 : vector<8x128xf32> to vector<1x8x128xf32>
    %31 = vector.shape_cast %30 : vector<1x8x128xf32> to vector<1x8x128xf32>
    %32 = vector.broadcast %31 : vector<1x8x128xf32> to vector<8x8x128xf32>
    %33 = arith.select %28, %32, %22 : vector<8x8x128xi1>, vector<8x8x128xf32>
    %34 = vector.shape_cast %33 : vector<8x8x128xf32> to vector<64x128xf32>
    %c0_15 = arith.constant 0 : index
    %c0_16 = arith.constant 0 : index
    %35 = vector.load %arg6[%c0_15, %c0_16] : memref<128x128xf32, #tpu.memory_space<vmem>>, vector<128x128xf32>
    %cst_17 = arith.constant dense<0.000000e+00> : vector<64x128xf32>
    %36 = tpu.matmul %34, %35, %cst_17 {dimension_numbers = #tpu.dot_dimension_numbers<[1], [0], [0], [1], [0, 0, 1, 1], [], []>} : vector<64x128xf32>, vector<128x128xf32>, vector<64x128xf32> -> vector<64x128xf32>
    %37 = arith.addf %8, %36 : vector<64x128xf32>
    %38 = math.tanh %37 : vector<64x128xf32>
    %c0_18 = arith.constant 0 : index
    %c0_19 = arith.constant 0 : index
    %39 = vector.load %arg5[%c0_18, %c0_19] : memref<128x128xf32, #tpu.memory_space<vmem>>, vector<128x128xf32>
    %cst_20 = arith.constant dense<0.000000e+00> : vector<64x128xf32>
    %40 = tpu.matmul %38, %39, %cst_20 {dimension_numbers = #tpu.dot_dimension_numbers<[1], [0], [0], [1], [0, 0, 1, 1], [], []>} : vector<64x128xf32>, vector<128x128xf32>, vector<64x128xf32> -> vector<64x128xf32>
    %c0_21 = arith.constant 0 : index
    %c0_22 = arith.constant 0 : index
    %41 = vector.load %arg8[%c0_21, %c0_22] : memref<1x128xf32, #tpu.memory_space<vmem>>, vector<1x128xf32>
    %42 = vector.broadcast %41 : vector<1x128xf32> to vector<64x128xf32>
    %43 = arith.addf %40, %42 : vector<64x128xf32>
    %44 = arith.negf %43 : vector<64x128xf32>
    %45 = math.exp %44 : vector<64x128xf32>
    %cst_23 = arith.constant 1.000000e+00 : f32
    %46 = vector.broadcast %cst_23 : f32 to vector<64x128xf32>
    %47 = arith.addf %46, %45 : vector<64x128xf32>
    %48 = arith.divf %46, %47 : vector<64x128xf32>
    %49 = vector.shape_cast %48 : vector<64x128xf32> to vector<8x8x128xf32>
    %50 = vector.extract_strided_slice %49 {offsets = [0, 0, 0], sizes = [8, 8, 1], strides = [1, 1, 1]} : vector<8x8x128xf32> to vector<8x8x1xf32>
    %c0_24 = arith.constant 0 : index
    %c0_25 = arith.constant 0 : index
    %c0_26 = arith.constant 0 : index
    %51 = vector.load %arg9[%c0_24, %c0_25, %c0_26] : memref<8x8x1xf32, #tpu.memory_space<vmem>>, vector<8x8x1xf32>
    tpu.vector_store %arg9[%c0_24, %c0_25, %c0_26], %50 {strides = array<i32>} : memref<8x8x1xf32, #tpu.memory_space<vmem>>, vector<8x8x1xf32>,
    %52 = vector.shape_cast %16 : vector<64x128xf32> to vector<8x8x128xf32>
    %53 = vector.extract_strided_slice %52 {offsets = [0, 0, 0], sizes = [8, 8, 32], strides = [1, 1, 1]} : vector<8x8x128xf32> to vector<8x8x32xf32>
    %c0_27 = arith.constant 0 : index
    %c0_28 = arith.constant 0 : index
    %c0_29 = arith.constant 0 : index
    %54 = vector.load %arg10[%c0_27, %c0_28, %c0_29] : memref<8x8x32xf32, #tpu.memory_space<vmem>>, vector<8x8x32xf32>
    tpu.vector_store %arg10[%c0_27, %c0_28, %c0_29], %53 {strides = array<i32>} : memref<8x8x32xf32, #tpu.memory_space<vmem>>, vector<8x8x32xf32>,
    return
  }
  func.func @transform_0(%arg0: i32) -> (i32, i32, i32) {
    %c0_i32 = arith.constant 0 : i32
    %c0_i32_0 = arith.constant 0 : i32
    %c0_i32_1 = arith.constant 0 : i32
    return %arg0, %c0_i32, %c0_i32_0 : i32, i32, i32
  }
  func.func @transform_1(%arg0: i32) -> (i32, i32, i32) {
    %c0_i32 = arith.constant 0 : i32
    %c0_i32_0 = arith.constant 0 : i32
    %c0_i32_1 = arith.constant 0 : i32
    return %arg0, %c0_i32, %c0_i32_0 : i32, i32, i32
  }
  func.func @transform_2(%arg0: i32) -> (i32, i32) {
    %c0_i32 = arith.constant 0 : i32
    %c0_i32_0 = arith.constant 0 : i32
    %c0_i32_1 = arith.constant 0 : i32
    return %c0_i32, %c0_i32_0 : i32, i32
  }
  func.func @transform_3(%arg0: i32) -> (i32, i32) {
    %c0_i32 = arith.constant 0 : i32
    %c0_i32_0 = arith.constant 0 : i32
    %c0_i32_1 = arith.constant 0 : i32
    return %c0_i32, %c0_i32_0 : i32, i32
  }
  func.func @transform_4(%arg0: i32) -> (i32, i32) {
    %c0_i32 = arith.constant 0 : i32
    %c0_i32_0 = arith.constant 0 : i32
    %c0_i32_1 = arith.constant 0 : i32
    return %c0_i32, %c0_i32_0 : i32, i32
  }
  func.func @transform_5(%arg0: i32) -> (i32, i32) {
    %c0_i32 = arith.constant 0 : i32
    %c0_i32_0 = arith.constant 0 : i32
    %c0_i32_1 = arith.constant 0 : i32
    return %c0_i32, %c0_i32_0 : i32, i32
  }
  func.func @transform_6(%arg0: i32) -> (i32, i32) {
    %c0_i32 = arith.constant 0 : i32
    %c0_i32_0 = arith.constant 0 : i32
    %c0_i32_1 = arith.constant 0 : i32
    return %c0_i32, %c0_i32_0 : i32, i32
  }
  func.func @transform_7(%arg0: i32) -> (i32, i32) {
    %c0_i32 = arith.constant 0 : i32
    %c0_i32_0 = arith.constant 0 : i32
    %c0_i32_1 = arith.constant 0 : i32
    return %c0_i32, %c0_i32_0 : i32, i32
  }
  func.func @transform_8(%arg0: i32) -> (i32, i32, i32) {
    %c0_i32 = arith.constant 0 : i32
    %c0_i32_0 = arith.constant 0 : i32
    %c0_i32_1 = arith.constant 0 : i32
    return %arg0, %c0_i32, %c0_i32_0 : i32, i32, i32
  }
  func.func @transform_9(%arg0: i32) -> (i32, i32, i32) {
    %c0_i32 = arith.constant 0 : i32
    %c0_i32_0 = arith.constant 0 : i32
    %c0_i32_1 = arith.constant 0 : i32
    return %arg0, %c0_i32, %c0_i32_0 : i32, i32, i32
  }
}

</mosaic_0001>

<llo_original>
// kernel: elman_sequence_forward.1
$region0: #{elman_sequence_forward.1}
  #allocation0 [shape = 'u32[]', space=smem, size = 0x4, offset = 0x4, fixed_abs, tag = 'smem constant byte address 0x4 - core index']
  #allocation1 [shape = 'u32[72,128]{1,0:T(1,128)}', space=vmem, size = 0x9000, scoped, tag = 'internal scratch']
  %s0 = inlined_call_operand.vmem [shape: f32[8,8,128], index: 0, kind: input, shape index: {}]
  %s1 = inlined_call_operand.vmem [shape: f32[8,8,128], index: 1, kind: input, shape index: {}]
  %s2 = inlined_call_operand.vmem [shape: f32[8,128], index: 2, kind: input, shape index: {}]
  %s3 = inlined_call_operand.vmem [shape: f32[128,128], index: 3, kind: input, shape index: {}]
  %s4 = inlined_call_operand.vmem [shape: f32[128,128], index: 4, kind: input, shape index: {}]
  %s5 = inlined_call_operand.vmem [shape: f32[128,128], index: 5, kind: input, shape index: {}]
  %s6 = inlined_call_operand.vmem [shape: f32[1,128], index: 6, kind: input, shape index: {}]
  %s7 = inlined_call_operand.vmem [shape: f32[1,128], index: 7, kind: input, shape index: {}]
  %s8 = inlined_call_operand.vmem [shape: f32[8,8,1], index: 8, kind: output, shape index: {0}]
  %s9 = inlined_call_operand.vmem [shape: f32[8,8,32], index: 9, kind: output, shape index: {1}]
  %10 = xla_tuple %s8, %s9
  %s11 = sld [smem:[#allocation0]]
  $region50: #{elman_sequence_forward.1} parent=0
    _
  %s13 = ssub.s32 1, %s11
  %s14 = scalar_select 0, %s13, %s11
  // Predicated region
  $region2: #{elman_sequence_forward.1} parent=0 // pred_check
    _
  $region3: #{elman_sequence_forward.1} parent=0 // pred_check_branch
    %16 = sbr.rel (0) target = $region5
  $region4: #{elman_sequence_forward.1} parent=0 // pred_region
    _
  $region5: #{elman_sequence_forward.1} parent=0 // pred_fallthru
    _
  // Predicated region
  $region6: #{elman_sequence_forward.1} parent=0 // pred_check
    _
  $region7: #{elman_sequence_forward.1} parent=0 // pred_check_branch
    %18 = sbr.rel (0) target = $region9
  $region8: #{elman_sequence_forward.1} parent=0 // pred_region
    _
  $region9: #{elman_sequence_forward.1} parent=0 // pred_fallthru
    _
  // Predicated region
  $region10: #{elman_sequence_forward.1} parent=0 // pred_check
    _
  $region11: #{elman_sequence_forward.1} parent=0 // pred_check_branch
    %20 = sbr.rel (0) target = $region13
  $region12: #{elman_sequence_forward.1} parent=0 // pred_region
    _
  $region13: #{elman_sequence_forward.1} parent=0 // pred_fallthru
    _
  // Predicated region
  $region14: #{elman_sequence_forward.1} parent=0 // pred_check
    _
  $region15: #{elman_sequence_forward.1} parent=0 // pred_check_branch
    %22 = sbr.rel (0) target = $region17
  $region16: #{elman_sequence_forward.1} parent=0 // pred_region
    _
  $region17: #{elman_sequence_forward.1} parent=0 // pred_fallthru
    _
  // Predicated region
  $region18: #{elman_sequence_forward.1} parent=0 // pred_check
    _
  $region19: #{elman_sequence_forward.1} parent=0 // pred_check_branch
    %24 = sbr.rel (0) target = $region21
  $region20: #{elman_sequence_forward.1} parent=0 // pred_region
    _
  $region21: #{elman_sequence_forward.1} parent=0 // pred_fallthru
    _
  // Predicated region
  $region22: #{elman_sequence_forward.1} parent=0 // pred_check
    _
  $region23: #{elman_sequence_forward.1} parent=0 // pred_check_branch
    %26 = sbr.rel (0) target = $region25
  $region24: #{elman_sequence_forward.1} parent=0 // pred_region
    _
  $region25: #{elman_sequence_forward.1} parent=0 // pred_fallthru
    _
  // Predicated region
  $region26: #{elman_sequence_forward.1} parent=0 // pred_check
    _
  $region27: #{elman_sequence_forward.1} parent=0 // pred_check_branch
    %28 = sbr.rel (0) target = $region29
  $region28: #{elman_sequence_forward.1} parent=0 // pred_region
    _
  $region29: #{elman_sequence_forward.1} parent=0 // pred_fallthru
    _
  // Predicated region
  $region30: #{elman_sequence_forward.1} parent=0 // pred_check
    _
  $region31: #{elman_sequence_forward.1} parent=0 // pred_check_branch
    %30 = sbr.rel (0) target = $region33
  $region32: #{elman_sequence_forward.1} parent=0 // pred_region
    _
  $region33: #{elman_sequence_forward.1} parent=0 // pred_fallthru
    _
  %v31 = vld [vmem:[%s0] sm:$0xff]
  %v32 = vld [vmem:[%s0 + $0x8] sm:$0xff]
  %v33 = vld [vmem:[%s0 + $0x10] sm:$0xff]
  %v34 = vld [vmem:[%s0 + $0x18] sm:$0xff]
  %v35 = vld [vmem:[%s0 + $0x20] sm:$0xff]
  %v36 = vld [vmem:[%s0 + $0x28] sm:$0xff]
  %v37 = vld [vmem:[%s0 + $0x30] sm:$0xff]
  %v38 = vld [vmem:[%s0 + $0x38] sm:$0xff]
  %v39 = vld [vmem:[%s1] sm:$0xff]
  %v40 = vld [vmem:[%s1 + $0x8] sm:$0xff]
  %v41 = vld [vmem:[%s1 + $0x10] sm:$0xff]
  %v42 = vld [vmem:[%s1 + $0x18] sm:$0xff]
  %v43 = vld [vmem:[%s1 + $0x20] sm:$0xff]
  %v44 = vld [vmem:[%s1 + $0x28] sm:$0xff]
  %v45 = vld [vmem:[%s1 + $0x30] sm:$0xff]
  %v46 = vld [vmem:[%s1 + $0x38] sm:$0xff]
  %v47 = vld [vmem:[%s3] sm:$0xff]
  %v48 = vld [vmem:[%s3 + $0x8] sm:$0xff]
  %v49 = vld [vmem:[%s3 + $0x10] sm:$0xff]
  %v50 = vld [vmem:[%s3 + $0x18] sm:$0xff]
  %v51 = vld [vmem:[%s3 + $0x20] sm:$0xff]
  %v52 = vld [vmem:[%s3 + $0x28] sm:$0xff]
  %v53 = vld [vmem:[%s3 + $0x30] sm:$0xff]
  %v54 = vld [vmem:[%s3 + $0x38] sm:$0xff]
  %v55 = vld [vmem:[%s3 + $0x40] sm:$0xff]
  %v56 = vld [vmem:[%s3 + $0x48] sm:$0xff]
  %v57 = vld [vmem:[%s3 + $0x50] sm:$0xff]
  %v58 = vld [vmem:[%s3 + $0x58] sm:$0xff]
  %v59 = vld [vmem:[%s3 + $0x60] sm:$0xff]
  %v60 = vld [vmem:[%s3 + $0x68] sm:$0xff]
  %v61 = vld [vmem:[%s3 + $0x70] sm:$0xff]
  %v62 = vld [vmem:[%s3 + $0x78] sm:$0xff]
  %v63 = vld [vmem:[%s6] sm:$0x1]
  %v65 = vperm.slane %v63, 0
  %67 = vmatpush.msra.mxu0 %v62
  %68 = vmatpush.msra.mxu0 %v61
  %69 = vmatpush.msra.mxu0 %v60
  %70 = vmatpush.msra.mxu0 %v59
  %71 = vmatpush.msra.mxu0 %v58
  %72 = vmatpush.msra.mxu0 %v57
  %73 = vmatpush.msra.mxu0 %v56
  %74 = vmatpush.msra.mxu0 %v55
  %75 = vmatpush.msra.mxu0 %v54
  %76 = vmatpush.msra.mxu0 %v53
  %77 = vmatpush.msra.mxu0 %v52
  %78 = vmatpush.msra.mxu0 %v51
  %79 = vmatpush.msra.mxu0 %v50
  %80 = vmatpush.msra.mxu0 %v49
  %81 = vmatpush.msra.mxu0 %v48
  %82 = vmatpush.msra.mxu0 %v47
  %83 = vmatmul.f32.gmra.mxu0 %v31
  %v84 = vpop.f32.mrf.mxu0
  %v85 = vadd.f32 %v65, %v84
  %86 = vmatmul.f32.gmra.mxu0 %v32
  %v87 = vpop.f32.mrf.mxu0
  %v88 = vadd.f32 %v65, %v87
  %89 = vmatmul.f32.gmra.mxu0 %v33
  %v90 = vpop.f32.mrf.mxu0
  %v91 = vadd.f32 %v65, %v90
  %92 = vmatmul.f32.gmra.mxu0 %v34
  %v93 = vpop.f32.mrf.mxu0
  %v94 = vadd.f32 %v65, %v93
  %95 = vmatmul.f32.gmra.mxu0 %v35
  %v96 = vpop.f32.mrf.mxu0
  %v97 = vadd.f32 %v65, %v96
  %98 = vmatmul.f32.gmra.mxu0 %v36
  %v99 = vpop.f32.mrf.mxu0
  %v100 = vadd.f32 %v65, %v99
  %101 = vmatmul.f32.gmra.mxu0 %v37
  %v102 = vpop.f32.mrf.mxu0
  %v103 = vadd.f32 %v65, %v102
  %104 = vmatmul.f32.gmra.mxu0 %v38
  %v105 = vpop.f32.mrf.mxu0
  %v106 = vadd.f32 %v65, %v105
  %107 = vdwg.mxu0
  %108 = vmatpush.msra.mxu0 %v62
  %109 = vmatpush.msra.mxu0 %v61
  %110 = vmatpush.msra.mxu0 %v60
  %111 = vmatpush.msra.mxu0 %v59
  %112 = vmatpush.msra.mxu0 %v58
  %113 = vmatpush.msra.mxu0 %v57
  %114 = vmatpush.msra.mxu0 %v56
  %115 = vmatpush.msra.mxu0 %v55
  %116 = vmatpush.msra.mxu0 %v54
  %117 = vmatpush.msra.mxu0 %v53
  %118 = vmatpush.msra.mxu0 %v52
  %119 = vmatpush.msra.mxu0 %v51
  %120 = vmatpush.msra.mxu0 %v50
  %121 = vmatpush.msra.mxu0 %v49
  %122 = vmatpush.msra.mxu0 %v48
  %123 = vmatpush.msra.mxu0 %v47
  %124 = vmatmul.f32.gmra.mxu0 %v39
  %v125 = vpop.f32.mrf.mxu0
  %v126 = vadd.f32 %v65, %v125
  %127 = vmatmul.f32.gmra.mxu0 %v40
  %v128 = vpop.f32.mrf.mxu0
  %v129 = vadd.f32 %v65, %v128
  %130 = vmatmul.f32.gmra.mxu0 %v41
  %v131 = vpop.f32.mrf.mxu0
  %v132 = vadd.f32 %v65, %v131
  %133 = vmatmul.f32.gmra.mxu0 %v42
  %v134 = vpop.f32.mrf.mxu0
  %v135 = vadd.f32 %v65, %v134
  %136 = vmatmul.f32.gmra.mxu0 %v43
  %v137 = vpop.f32.mrf.mxu0
  %v138 = vadd.f32 %v65, %v137
  %139 = vmatmul.f32.gmra.mxu0 %v44
  %v140 = vpop.f32.mrf.mxu0
  %v141 = vadd.f32 %v65, %v140
  %142 = vmatmul.f32.gmra.mxu0 %v45
  %v143 = vpop.f32.mrf.mxu0
  %v144 = vadd.f32 %v65, %v143
  %145 = vmatmul.f32.gmra.mxu0 %v46
  %v146 = vpop.f32.mrf.mxu0
  %v147 = vadd.f32 %v65, %v146
  %148 = vdwg.mxu0
  %v149 = vxor.u32 %v85, 2147483648
  %v150 = vxor.u32 %v88, 2147483648
  %v151 = vxor.u32 %v91, 2147483648
  %v152 = vxor.u32 %v94, 2147483648
  %v153 = vxor.u32 %v97, 2147483648
  %v154 = vxor.u32 %v100, 2147483648
  %v155 = vxor.u32 %v103, 2147483648
  %v156 = vxor.u32 %v106, 2147483648
  %v157 = vmul.f32 %v149, 1.442695
  %v158 = vpow.pop %v157
  %v159 = vmul.f32 %v150, 1.442695
  %v160 = vpow.pop %v159
  %v161 = vmul.f32 %v151, 1.442695
  %v162 = vpow.pop %v161
  %v163 = vmul.f32 %v152, 1.442695
  %v164 = vpow.pop %v163
  %v165 = vmul.f32 %v153, 1.442695
  %v166 = vpow.pop %v165
  %v167 = vmul.f32 %v154, 1.442695
  %v168 = vpow.pop %v167
  %v169 = vmul.f32 %v155, 1.442695
  %v170 = vpow.pop %v169
  %v171 = vmul.f32 %v156, 1.442695
  %v172 = vpow.pop %v171
  %v173 = vadd.f32 %v158, 1.0
  %v174 = vadd.f32 %v160, 1.0
  %v175 = vadd.f32 %v162, 1.0
  %v176 = vadd.f32 %v164, 1.0
  %v177 = vadd.f32 %v166, 1.0
  %v178 = vadd.f32 %v168, 1.0
  %v179 = vadd.f32 %v170, 1.0
  %v180 = vadd.f32 %v172, 1.0
  %v181 = vrcp.pop %v173
  %v182 = vmul.f32 %v173, %v181
  %v183 = vsub.f32 1.0, %v182
  %v184 = vmul.f32 %v181, %v183
  %v185 = vadd.f32 %v181, %v184
  %vm186 = vweird.f32 %v173
  %vm187 = vweird.f32 %v181
  %vm188 = vmor %vm186, %vm187
  %v189 = vsel %vm188, %v181, %v185
  %v190 = vand.u32 2147483647, %v173
  %vm191 = vcmp.eq.f32.partialorder %v190, 8.507059e+37
  %v192 = vand.u32 %v173, 2147483648
  %v193 = vor.u32 1.1754944e-38, %v192
  %v194 = vsel %vm191, %v193, %v189
  %v195 = vmul.f32 1.0, %v194
  %v196 = vrcp.pop %v174
  %v197 = vmul.f32 %v174, %v196
  %v198 = vsub.f32 1.0, %v197
  %v199 = vmul.f32 %v196, %v198
  %v200 = vadd.f32 %v196, %v199
  %vm201 = vweird.f32 %v174
  %vm202 = vweird.f32 %v196
  %vm203 = vmor %vm201, %vm202
  %v204 = vsel %vm203, %v196, %v200
  %v205 = vand.u32 2147483647, %v174
  %vm206 = vcmp.eq.f32.partialorder %v205, 8.507059e+37
  %v207 = vand.u32 %v174, 2147483648
  %v208 = vor.u32 1.1754944e-38, %v207
  %v209 = vsel %vm206, %v208, %v204
  %v210 = vmul.f32 1.0, %v209
  %v211 = vrcp.pop %v175
  %v212 = vmul.f32 %v175, %v211
  %v213 = vsub.f32 1.0, %v212
  %v214 = vmul.f32 %v211, %v213
  %v215 = vadd.f32 %v211, %v214
  %vm216 = vweird.f32 %v175
  %vm217 = vweird.f32 %v211
  %vm218 = vmor %vm216, %vm217
  %v219 = vsel %vm218, %v211, %v215
  %v220 = vand.u32 2147483647, %v175
  %vm221 = vcmp.eq.f32.partialorder %v220, 8.507059e+37
  %v222 = vand.u32 %v175, 2147483648
  %v223 = vor.u32 1.1754944e-38, %v222
  %v224 = vsel %vm221, %v223, %v219
  %v225 = vmul.f32 1.0, %v224
  %v226 = vrcp.pop %v176
  %v227 = vmul.f32 %v176, %v226
  %v228 = vsub.f32 1.0, %v227
  %v229 = vmul.f32 %v226, %v228
  %v230 = vadd.f32 %v226, %v229
  %vm231 = vweird.f32 %v176
  %vm232 = vweird.f32 %v226
  %vm233 = vmor %vm231, %vm232
  %v234 = vsel %vm233, %v226, %v230
  %v235 = vand.u32 2147483647, %v176
  %vm236 = vcmp.eq.f32.partialorder %v235, 8.507059e+37
  %v237 = vand.u32 %v176, 2147483648
  %v238 = vor.u32 1.1754944e-38, %v237
  %v239 = vsel %vm236, %v238, %v234
  %v240 = vmul.f32 1.0, %v239
  %v241 = vrcp.pop %v177
  %v242 = vmul.f32 %v177, %v241
  %v243 = vsub.f32 1.0, %v242
  %v244 = vmul.f32 %v241, %v243
  %v245 = vadd.f32 %v241, %v244
  %vm246 = vweird.f32 %v177
  %vm247 = vweird.f32 %v241
  %vm248 = vmor %vm246, %vm247
  %v249 = vsel %vm248, %v241, %v245
  %v250 = vand.u32 2147483647, %v177
  %vm251 = vcmp.eq.f32.partialorder %v250, 8.507059e+37
  %v252 = vand.u32 %v177, 2147483648
  %v253 = vor.u32 1.1754944e-38, %v252
  %v254 = vsel %vm251, %v253, %v249
  %v255 = vmul.f32 1.0, %v254
  %v256 = vrcp.pop %v178
  %v257 = vmul.f32 %v178, %v256
  %v258 = vsub.f32 1.0, %v257
  %v259 = vmul.f32 %v256, %v258
  %v260 = vadd.f32 %v256, %v259
  %vm261 = vweird.f32 %v178
  %vm262 = vweird.f32 %v256
  %vm263 = vmor %vm261, %vm262
  %v264 = vsel %vm263, %v256, %v260
  %v265 = vand.u32 2147483647, %v178
  %vm266 = vcmp.eq.f32.partialorder %v265, 8.507059e+37
  %v267 = vand.u32 %v178, 2147483648
  %v268 = vor.u32 1.1754944e-38, %v267
  %v269 = vsel %vm266, %v268, %v264
  %v270 = vmul.f32 1.0, %v269
  %v271 = vrcp.pop %v179
  %v272 = vmul.f32 %v179, %v271
  %v273 = vsub.f32 1.0, %v272
  %v274 = vmul.f32 %v271, %v273
  %v275 = vadd.f32 %v271, %v274
  %vm276 = vweird.f32 %v179
  %vm277 = vweird.f32 %v271
  %vm278 = vmor %vm276, %vm277
  %v279 = vsel %vm278, %v271, %v275
  %v280 = vand.u32 2147483647, %v179
  %vm281 = vcmp.eq.f32.partialorder %v280, 8.507059e+37
  %v282 = vand.u32 %v179, 2147483648
  %v283 = vor.u32 1.1754944e-38, %v282
  %v284 = vsel %vm281, %v283, %v279
  %v285 = vmul.f32 1.0, %v284
  %v286 = vrcp.pop %v180
  %v287 = vmul.f32 %v180, %v286
  %v288 = vsub.f32 1.0, %v287
  %v289 = vmul.f32 %v286, %v288
  %v290 = vadd.f32 %v286, %v289
  %vm291 = vweird.f32 %v180
  %vm292 = vweird.f32 %v286
  %vm293 = vmor %vm291, %vm292
  %v294 = vsel %vm293, %v286, %v290
  %v295 = vand.u32 2147483647, %v180
  %vm296 = vcmp.eq.f32.partialorder %v295, 8.507059e+37
  %v297 = vand.u32 %v180, 2147483648
  %v298 = vor.u32 1.1754944e-38, %v297
  %v299 = vsel %vm296, %v298, %v294
  %v300 = vmul.f32 1.0, %v299
  %v301 = vxor.u32 %v126, 2147483648
  %v302 = vxor.u32 %v129, 2147483648
  %v303 = vxor.u32 %v132, 2147483648
  %v304 = vxor.u32 %v135, 2147483648
  %v305 = vxor.u32 %v138, 2147483648
  %v306 = vxor.u32 %v141, 2147483648
  %v307 = vxor.u32 %v144, 2147483648
  %v308 = vxor.u32 %v147, 2147483648
  %v309 = vmul.f32 %v301, 1.442695
  %v310 = vpow.pop %v309
  %v311 = vmul.f32 %v302, 1.442695
  %v312 = vpow.pop %v311
  %v313 = vmul.f32 %v303, 1.442695
  %v314 = vpow.pop %v313
  %v315 = vmul.f32 %v304, 1.442695
  %v316 = vpow.pop %v315
  %v317 = vmul.f32 %v305, 1.442695
  %v318 = vpow.pop %v317
  %v319 = vmul.f32 %v306, 1.442695
  %v320 = vpow.pop %v319
  %v321 = vmul.f32 %v307, 1.442695
  %v322 = vpow.pop %v321
  %v323 = vmul.f32 %v308, 1.442695
  %v324 = vpow.pop %v323
  %v325 = vadd.f32 %v310, 1.0
  %v326 = vadd.f32 %v312, 1.0
  %v327 = vadd.f32 %v314, 1.0
  %v328 = vadd.f32 %v316, 1.0
  %v329 = vadd.f32 %v318, 1.0
  %v330 = vadd.f32 %v320, 1.0
  %v331 = vadd.f32 %v322, 1.0
  %v332 = vadd.f32 %v324, 1.0
  %v333 = vrcp.pop %v325
  %v334 = vmul.f32 %v325, %v333
  %v335 = vsub.f32 1.0, %v334
  %v336 = vmul.f32 %v333, %v335
  %v337 = vadd.f32 %v333, %v336
  %vm338 = vweird.f32 %v325
  %vm339 = vweird.f32 %v333
  %vm340 = vmor %vm338, %vm339
  %v341 = vsel %vm340, %v333, %v337
  %v342 = vand.u32 2147483647, %v325
  %vm343 = vcmp.eq.f32.partialorder %v342, 8.507059e+37
  %v344 = vand.u32 %v325, 2147483648
  %v345 = vor.u32 1.1754944e-38, %v344
  %v346 = vsel %vm343, %v345, %v341
  %v347 = vmul.f32 1.0, %v346
  %v348 = vrcp.pop %v326
  %v349 = vmul.f32 %v326, %v348
  %v350 = vsub.f32 1.0, %v349
  %v351 = vmul.f32 %v348, %v350
  %v352 = vadd.f32 %v348, %v351
  %vm353 = vweird.f32 %v326
  %vm354 = vweird.f32 %v348
  %vm355 = vmor %vm353, %vm354
  %v356 = vsel %vm355, %v348, %v352
  %v357 = vand.u32 2147483647, %v326
  %vm358 = vcmp.eq.f32.partialorder %v357, 8.507059e+37
  %v359 = vand.u32 %v326, 2147483648
  %v360 = vor.u32 1.1754944e-38, %v359
  %v361 = vsel %vm358, %v360, %v356
  %v362 = vmul.f32 1.0, %v361
  %v363 = vrcp.pop %v327
  %v364 = vmul.f32 %v327, %v363
  %v365 = vsub.f32 1.0, %v364
  %v366 = vmul.f32 %v363, %v365
  %v367 = vadd.f32 %v363, %v366
  %vm368 = vweird.f32 %v327
  %vm369 = vweird.f32 %v363
  %vm370 = vmor %vm368, %vm369
  %v371 = vsel %vm370, %v363, %v367
  %v372 = vand.u32 2147483647, %v327
  %vm373 = vcmp.eq.f32.partialorder %v372, 8.507059e+37
  %v374 = vand.u32 %v327, 2147483648
  %v375 = vor.u32 1.1754944e-38, %v374
  %v376 = vsel %vm373, %v375, %v371
  %v377 = vmul.f32 1.0, %v376
  %v378 = vrcp.pop %v328
  %v379 = vmul.f32 %v328, %v378
  %v380 = vsub.f32 1.0, %v379
  %v381 = vmul.f32 %v378, %v380
  %v382 = vadd.f32 %v378, %v381
  %vm383 = vweird.f32 %v328
  %vm384 = vweird.f32 %v378
  %vm385 = vmor %vm383, %vm384
  %v386 = vsel %vm385, %v378, %v382
  %v387 = vand.u32 2147483647, %v328
  %vm388 = vcmp.eq.f32.partialorder %v387, 8.507059e+37
  %v389 = vand.u32 %v328, 2147483648
  %v390 = vor.u32 1.1754944e-38, %v389
  %v391 = vsel %vm388, %v390, %v386
  %v392 = vmul.f32 1.0, %v391
  %v393 = vrcp.pop %v329
  %v394 = vmul.f32 %v329, %v393
  %v395 = vsub.f32 1.0, %v394
  %v396 = vmul.f32 %v393, %v395
  %v397 = vadd.f32 %v393, %v396
  %vm398 = vweird.f32 %v329
  %vm399 = vweird.f32 %v393
  %vm400 = vmor %vm398, %vm399
  %v401 = vsel %vm400, %v393, %v397
  %v402 = vand.u32 2147483647, %v329
  %vm403 = vcmp.eq.f32.partialorder %v402, 8.507059e+37
  %v404 = vand.u32 %v329, 2147483648
  %v405 = vor.u32 1.1754944e-38, %v404
  %v406 = vsel %vm403, %v405, %v401
  %v407 = vmul.f32 1.0, %v406
  %v408 = vrcp.pop %v330
  %v409 = vmul.f32 %v330, %v408
  %v410 = vsub.f32 1.0, %v409
  %v411 = vmul.f32 %v408, %v410
  %v412 = vadd.f32 %v408, %v411
  %vm413 = vweird.f32 %v330
  %vm414 = vweird.f32 %v408
  %vm415 = vmor %vm413, %vm414
  %v416 = vsel %vm415, %v408, %v412
  %v417 = vand.u32 2147483647, %v330
  %vm418 = vcmp.eq.f32.partialorder %v417, 8.507059e+37
  %v419 = vand.u32 %v330, 2147483648
  %v420 = vor.u32 1.1754944e-38, %v419
  %v421 = vsel %vm418, %v420, %v416
  %v422 = vmul.f32 1.0, %v421
  %v423 = vrcp.pop %v331
  %v424 = vmul.f32 %v331, %v423
  %v425 = vsub.f32 1.0, %v424
  %v426 = vmul.f32 %v423, %v425
  %v427 = vadd.f32 %v423, %v426
  %vm428 = vweird.f32 %v331
  %vm429 = vweird.f32 %v423
  %vm430 = vmor %vm428, %vm429
  %v431 = vsel %vm430, %v423, %v427
  %v432 = vand.u32 2147483647, %v331
  %vm433 = vcmp.eq.f32.partialorder %v432, 8.507059e+37
  %v434 = vand.u32 %v331, 2147483648
  %v435 = vor.u32 1.1754944e-38, %v434
  %v436 = vsel %vm433, %v435, %v431
  %v437 = vmul.f32 1.0, %v436
  %v438 = vrcp.pop %v332
  %v439 = vmul.f32 %v332, %v438
  %v440 = vsub.f32 1.0, %v439
  %v441 = vmul.f32 %v438, %v440
  %v442 = vadd.f32 %v438, %v441
  %vm443 = vweird.f32 %v332
  %vm444 = vweird.f32 %v438
  %vm445 = vmor %vm443, %vm444
  %v446 = vsel %vm445, %v438, %v442
  %v447 = vand.u32 2147483647, %v332
  %vm448 = vcmp.eq.f32.partialorder %v447, 8.507059e+37
  %v449 = vand.u32 %v332, 2147483648
  %v450 = vor.u32 1.1754944e-38, %v449
  %v451 = vsel %vm448, %v450, %v446
  %v452 = vmul.f32 1.0, %v451
  %p453 = scmp.eq.s32.totalorder 0, 0
  %s454 = scalar_select %p453, 1, 0
  %v455 = vstv %s454
  %vm456 = vcmp.eq.s32.totalorder %v455, 1
  %v457 = vld [vmem:[%s2] sm:$0xff]
  %v458 = vsel %vm456, %v457, %v347
  %v459 = vsel 0, %v457, %v362
  %v460 = vsel 0, %v457, %v377
  %v461 = vsel 0, %v457, %v392
  %v462 = vsel 0, %v457, %v407
  %v463 = vsel 0, %v457, %v422
  %v464 = vsel 0, %v457, %v437
  %v465 = vsel 0, %v457, %v452
  %v466 = vld [vmem:[%s5] sm:$0xff]
  %v467 = vld [vmem:[%s5 + $0x8] sm:$0xff]
  %v468 = vld [vmem:[%s5 + $0x10] sm:$0xff]
  %v469 = vld [vmem:[%s5 + $0x18] sm:$0xff]
  %v470 = vld [vmem:[%s5 + $0x20] sm:$0xff]
  %v471 = vld [vmem:[%s5 + $0x28] sm:$0xff]
  %v472 = vld [vmem:[%s5 + $0x30] sm:$0xff]
  %v473 = vld [vmem:[%s5 + $0x38] sm:$0xff]
  %v474 = vld [vmem:[%s5 + $0x40] sm:$0xff]
  %v475 = vld [vmem:[%s5 + $0x48] sm:$0xff]
  %v476 = vld [vmem:[%s5 + $0x50] sm:$0xff]
  %v477 = vld [vmem:[%s5 + $0x58] sm:$0xff]
  %v478 = vld [vmem:[%s5 + $0x60] sm:$0xff]
  %v479 = vld [vmem:[%s5 + $0x68] sm:$0xff]
  %v480 = vld [vmem:[%s5 + $0x70] sm:$0xff]
  %v481 = vld [vmem:[%s5 + $0x78] sm:$0xff]
  %482 = vmatpush.msra.mxu0 %v481
  %483 = vmatpush.msra.mxu0 %v480
  %484 = vmatpush.msra.mxu0 %v479
  %485 = vmatpush.msra.mxu0 %v478
  %486 = vmatpush.msra.mxu0 %v477
  %487 = vmatpush.msra.mxu0 %v476
  %488 = vmatpush.msra.mxu0 %v475
  %489 = vmatpush.msra.mxu0 %v474
  %490 = vmatpush.msra.mxu0 %v473
  %491 = vmatpush.msra.mxu0 %v472
  %492 = vmatpush.msra.mxu0 %v471
  %493 = vmatpush.msra.mxu0 %v470
  %494 = vmatpush.msra.mxu0 %v469
  %495 = vmatpush.msra.mxu0 %v468
  %496 = vmatpush.msra.mxu0 %v467
  %497 = vmatpush.msra.mxu0 %v466
  %498 = vmatmul.f32.gmra.mxu0 %v458
  %v499 = vpop.f32.mrf.mxu0
  %v500 = vadd.f32 0.0, %v499
  %501 = vmatmul.f32.gmra.mxu0 %v459
  %v502 = vpop.f32.mrf.mxu0
  %v503 = vadd.f32 0.0, %v502
  %504 = vmatmul.f32.gmra.mxu0 %v460
  %v505 = vpop.f32.mrf.mxu0
  %v506 = vadd.f32 0.0, %v505
  %507 = vmatmul.f32.gmra.mxu0 %v461
  %v508 = vpop.f32.mrf.mxu0
  %v509 = vadd.f32 0.0, %v508
  %510 = vmatmul.f32.gmra.mxu0 %v462
  %v511 = vpop.f32.mrf.mxu0
  %v512 = vadd.f32 0.0, %v511
  %513 = vmatmul.f32.gmra.mxu0 %v463
  %v514 = vpop.f32.mrf.mxu0
  %v515 = vadd.f32 0.0, %v514
  %516 = vmatmul.f32.gmra.mxu0 %v464
  %v517 = vpop.f32.mrf.mxu0
  %v518 = vadd.f32 0.0, %v517
  %519 = vmatmul.f32.gmra.mxu0 %v465
  %v520 = vpop.f32.mrf.mxu0
  %v521 = vadd.f32 0.0, %v520
  %522 = vdwg.mxu0
  %v523 = vadd.f32 %v85, %v500
  %v524 = vadd.f32 %v88, %v503
  %v525 = vadd.f32 %v91, %v506
  %v526 = vadd.f32 %v94, %v509
  %v527 = vadd.f32 %v97, %v512
  %v528 = vadd.f32 %v100, %v515
  %v529 = vadd.f32 %v103, %v518
  %v530 = vadd.f32 %v106, %v521
  %v531 = vtanh.pop %v523
  %v532 = vtanh.pop %v524
  %v533 = vtanh.pop %v525
  %v534 = vtanh.pop %v526
  %v535 = vtanh.pop %v527
  %v536 = vtanh.pop %v528
  %v537 = vtanh.pop %v529
  %v538 = vtanh.pop %v530
  %v539 = vld [vmem:[%s4] sm:$0xff]
  %v540 = vld [vmem:[%s4 + $0x8] sm:$0xff]
  %v541 = vld [vmem:[%s4 + $0x10] sm:$0xff]
  %v542 = vld [vmem:[%s4 + $0x18] sm:$0xff]
  %v543 = vld [vmem:[%s4 + $0x20] sm:$0xff]
  %v544 = vld [vmem:[%s4 + $0x28] sm:$0xff]
  %v545 = vld [vmem:[%s4 + $0x30] sm:$0xff]
  %v546 = vld [vmem:[%s4 + $0x38] sm:$0xff]
  %v547 = vld [vmem:[%s4 + $0x40] sm:$0xff]
  %v548 = vld [vmem:[%s4 + $0x48] sm:$0xff]
  %v549 = vld [vmem:[%s4 + $0x50] sm:$0xff]
  %v550 = vld [vmem:[%s4 + $0x58] sm:$0xff]
  %v551 = vld [vmem:[%s4 + $0x60] sm:$0xff]
  %v552 = vld [vmem:[%s4 + $0x68] sm:$0xff]
  %v553 = vld [vmem:[%s4 + $0x70] sm:$0xff]
  %v554 = vld [vmem:[%s4 + $0x78] sm:$0xff]
  %v555 = vld [vmem:[%s7] sm:$0x1]
  %v557 = vperm.slane %v555, 0
  %559 = vmatpush.msra.mxu0 %v554
  %560 = vmatpush.msra.mxu0 %v553
  %561 = vmatpush.msra.mxu0 %v552
  %562 = vmatpush.msra.mxu0 %v551
  %563 = vmatpush.msra.mxu0 %v550
  %564 = vmatpush.msra.mxu0 %v549
  %565 = vmatpush.msra.mxu0 %v548
  %566 = vmatpush.msra.mxu0 %v547
  %567 = vmatpush.msra.mxu0 %v546
  %568 = vmatpush.msra.mxu0 %v545
  %569 = vmatpush.msra.mxu0 %v544
  %570 = vmatpush.msra.mxu0 %v543
  %571 = vmatpush.msra.mxu0 %v542
  %572 = vmatpush.msra.mxu0 %v541
  %573 = vmatpush.msra.mxu0 %v540
  %574 = vmatpush.msra.mxu0 %v539
  %575 = vmatmul.f32.gmra.mxu0 %v531
  %v576 = vpop.f32.mrf.mxu0
  %v577 = vadd.f32 %v557, %v576
  %578 = vmatmul.f32.gmra.mxu0 %v532
  %v579 = vpop.f32.mrf.mxu0
  %v580 = vadd.f32 %v557, %v579
  %581 = vmatmul.f32.gmra.mxu0 %v533
  %v582 = vpop.f32.mrf.mxu0
  %v583 = vadd.f32 %v557, %v582
  %584 = vmatmul.f32.gmra.mxu0 %v534
  %v585 = vpop.f32.mrf.mxu0
  %v586 = vadd.f32 %v557, %v585
  %587 = vmatmul.f32.gmra.mxu0 %v535
  %v588 = vpop.f32.mrf.mxu0
  %v589 = vadd.f32 %v557, %v588
  %590 = vmatmul.f32.gmra.mxu0 %v536
  %v591 = vpop.f32.mrf.mxu0
  %v592 = vadd.f32 %v557, %v591
  %593 = vmatmul.f32.gmra.mxu0 %v537
  %v594 = vpop.f32.mrf.mxu0
  %v595 = vadd.f32 %v557, %v594
  %596 = vmatmul.f32.gmra.mxu0 %v538
  %v597 = vpop.f32.mrf.mxu0
  %v598 = vadd.f32 %v557, %v597
  %599 = vdwg.mxu0
  %v600 = vxor.u32 %v577, 2147483648
  %v601 = vxor.u32 %v580, 2147483648
  %v602 = vxor.u32 %v583, 2147483648
  %v603 = vxor.u32 %v586, 2147483648
  %v604 = vxor.u32 %v589, 2147483648
  %v605 = vxor.u32 %v592, 2147483648
  %v606 = vxor.u32 %v595, 2147483648
  %v607 = vxor.u32 %v598, 2147483648
  %v608 = vmul.f32 %v600, 1.442695
  %v609 = vpow.pop %v608
  %v610 = vmul.f32 %v601, 1.442695
  %v611 = vpow.pop %v610
  %v612 = vmul.f32 %v602, 1.442695
  %v613 = vpow.pop %v612
  %v614 = vmul.f32 %v603, 1.442695
  %v615 = vpow.pop %v614
  %v616 = vmul.f32 %v604, 1.442695
  %v617 = vpow.pop %v616
  %v618 = vmul.f32 %v605, 1.442695
  %v619 = vpow.pop %v618
  %v620 = vmul.f32 %v606, 1.442695
  %v621 = vpow.pop %v620
  %v622 = vmul.f32 %v607, 1.442695
  %v623 = vpow.pop %v622
  %v624 = vadd.f32 %v609, 1.0
  %v625 = vadd.f32 %v611, 1.0
  %v626 = vadd.f32 %v613, 1.0
  %v627 = vadd.f32 %v615, 1.0
  %v628 = vadd.f32 %v617, 1.0
  %v629 = vadd.f32 %v619, 1.0
  %v630 = vadd.f32 %v621, 1.0
  %v631 = vadd.f32 %v623, 1.0
  %v632 = vrcp.pop %v624
  %v633 = vmul.f32 %v624, %v632
  %v634 = vsub.f32 1.0, %v633
  %v635 = vmul.f32 %v632, %v634
  %v636 = vadd.f32 %v632, %v635
  %vm637 = vweird.f32 %v624
  %vm638 = vweird.f32 %v632
  %vm639 = vmor %vm637, %vm638
  %v640 = vsel %vm639, %v632, %v636
  %v641 = vand.u32 2147483647, %v624
  %vm642 = vcmp.eq.f32.partialorder %v641, 8.507059e+37
  %v643 = vand.u32 %v624, 2147483648
  %v644 = vor.u32 1.1754944e-38, %v643
  %v645 = vsel %vm642, %v644, %v640
  %v646 = vmul.f32 1.0, %v645
  %v647 = vrcp.pop %v625
  %v648 = vmul.f32 %v625, %v647
  %v649 = vsub.f32 1.0, %v648
  %v650 = vmul.f32 %v647, %v649
  %v651 = vadd.f32 %v647, %v650
  %vm652 = vweird.f32 %v625
  %vm653 = vweird.f32 %v647
  %vm654 = vmor %vm652, %vm653
  %v655 = vsel %vm654, %v647, %v651
  %v656 = vand.u32 2147483647, %v625
  %vm657 = vcmp.eq.f32.partialorder %v656, 8.507059e+37
  %v658 = vand.u32 %v625, 2147483648
  %v659 = vor.u32 1.1754944e-38, %v658
  %v660 = vsel %vm657, %v659, %v655
  %v661 = vmul.f32 1.0, %v660
  %v662 = vrcp.pop %v626
  %v663 = vmul.f32 %v626, %v662
  %v664 = vsub.f32 1.0, %v663
  %v665 = vmul.f32 %v662, %v664
  %v666 = vadd.f32 %v662, %v665
  %vm667 = vweird.f32 %v626
  %vm668 = vweird.f32 %v662
  %vm669 = vmor %vm667, %vm668
  %v670 = vsel %vm669, %v662, %v666
  %v671 = vand.u32 2147483647, %v626
  %vm672 = vcmp.eq.f32.partialorder %v671, 8.507059e+37
  %v673 = vand.u32 %v626, 2147483648
  %v674 = vor.u32 1.1754944e-38, %v673
  %v675 = vsel %vm672, %v674, %v670
  %v676 = vmul.f32 1.0, %v675
  %v677 = vrcp.pop %v627
  %v678 = vmul.f32 %v627, %v677
  %v679 = vsub.f32 1.0, %v678
  %v680 = vmul.f32 %v677, %v679
  %v681 = vadd.f32 %v677, %v680
  %vm682 = vweird.f32 %v627
  %vm683 = vweird.f32 %v677
  %vm684 = vmor %vm682, %vm683
  %v685 = vsel %vm684, %v677, %v681
  %v686 = vand.u32 2147483647, %v627
  %vm687 = vcmp.eq.f32.partialorder %v686, 8.507059e+37
  %v688 = vand.u32 %v627, 2147483648
  %v689 = vor.u32 1.1754944e-38, %v688
  %v690 = vsel %vm687, %v689, %v685
  %v691 = vmul.f32 1.0, %v690
  %v692 = vrcp.pop %v628
  %v693 = vmul.f32 %v628, %v692
  %v694 = vsub.f32 1.0, %v693
  %v695 = vmul.f32 %v692, %v694
  %v696 = vadd.f32 %v692, %v695
  %vm697 = vweird.f32 %v628
  %vm698 = vweird.f32 %v692
  %vm699 = vmor %vm697, %vm698
  %v700 = vsel %vm699, %v692, %v696
  %v701 = vand.u32 2147483647, %v628
  %vm702 = vcmp.eq.f32.partialorder %v701, 8.507059e+37
  %v703 = vand.u32 %v628, 2147483648
  %v704 = vor.u32 1.1754944e-38, %v703
  %v705 = vsel %vm702, %v704, %v700
  %v706 = vmul.f32 1.0, %v705
  %v707 = vrcp.pop %v629
  %v708 = vmul.f32 %v629, %v707
  %v709 = vsub.f32 1.0, %v708
  %v710 = vmul.f32 %v707, %v709
  %v711 = vadd.f32 %v707, %v710
  %vm712 = vweird.f32 %v629
  %vm713 = vweird.f32 %v707
  %vm714 = vmor %vm712, %vm713
  %v715 = vsel %vm714, %v707, %v711
  %v716 = vand.u32 2147483647, %v629
  %vm717 = vcmp.eq.f32.partialorder %v716, 8.507059e+37
  %v718 = vand.u32 %v629, 2147483648
  %v719 = vor.u32 1.1754944e-38, %v718
  %v720 = vsel %vm717, %v719, %v715
  %v721 = vmul.f32 1.0, %v720
  %v722 = vrcp.pop %v630
  %v723 = vmul.f32 %v630, %v722
  %v724 = vsub.f32 1.0, %v723
  %v725 = vmul.f32 %v722, %v724
  %v726 = vadd.f32 %v722, %v725
  %vm727 = vweird.f32 %v630
  %vm728 = vweird.f32 %v722
  %vm729 = vmor %vm727, %vm728
  %v730 = vsel %vm729, %v722, %v726
  %v731 = vand.u32 2147483647, %v630
  %vm732 = vcmp.eq.f32.partialorder %v731, 8.507059e+37
  %v733 = vand.u32 %v630, 2147483648
  %v734 = vor.u32 1.1754944e-38, %v733
  %v735 = vsel %vm732, %v734, %v730
  %v736 = vmul.f32 1.0, %v735
  %v737 = vrcp.pop %v631
  %v738 = vmul.f32 %v631, %v737
  %v739 = vsub.f32 1.0, %v738
  %v740 = vmul.f32 %v737, %v739
  %v741 = vadd.f32 %v737, %v740
  %vm742 = vweird.f32 %v631
  %vm743 = vweird.f32 %v737
  %vm744 = vmor %vm742, %vm743
  %v745 = vsel %vm744, %v737, %v741
  %v746 = vand.u32 2147483647, %v631
  %vm747 = vcmp.eq.f32.partialorder %v746, 8.507059e+37
  %v748 = vand.u32 %v631, 2147483648
  %v749 = vor.u32 1.1754944e-38, %v748
  %v750 = vsel %vm747, %v749, %v745
  %v751 = vmul.f32 1.0, %v750
  %vm752 = vcmask 7168
  %753 = vst.msk [vmem:[%s8] sm:$0xff] %vm752, %v646
  %754 = vst.msk [vmem:[%s8 + $0x8] sm:$0xff] %vm752, %v661
  %755 = vst.msk [vmem:[%s8 + $0x10] sm:$0xff] %vm752, %v676
  %756 = vst.msk [vmem:[%s8 + $0x18] sm:$0xff] %vm752, %v691
  %757 = vst.msk [vmem:[%s8 + $0x20] sm:$0xff] %vm752, %v706
  %758 = vst.msk [vmem:[%s8 + $0x28] sm:$0xff] %vm752, %v721
  %759 = vst.msk [vmem:[%s8 + $0x30] sm:$0xff] %vm752, %v736
  %760 = vst.msk [vmem:[%s8 + $0x38] sm:$0xff] %vm752, %v751
  %vm761 = vcmask 261120
  %762 = vst.msk [vmem:[%s9] sm:$0xff] %vm761, %v195
  %763 = vst.msk [vmem:[%s9 + $0x8] sm:$0xff] %vm761, %v210
  %764 = vst.msk [vmem:[%s9 + $0x10] sm:$0xff] %vm761, %v225
  %765 = vst.msk [vmem:[%s9 + $0x18] sm:$0xff] %vm761, %v240
  %766 = vst.msk [vmem:[%s9 + $0x20] sm:$0xff] %vm761, %v255
  %767 = vst.msk [vmem:[%s9 + $0x28] sm:$0xff] %vm761, %v270
  %768 = vst.msk [vmem:[%s9 + $0x30] sm:$0xff] %vm761, %v285
  %769 = vst.msk [vmem:[%s9 + $0x38] sm:$0xff] %vm761, %v300
  // Predicated region
  $region34: #{elman_sequence_forward.1} parent=0 // pred_check
    _
  $region35: #{elman_sequence_forward.1} parent=0 // pred_check_branch
    %771 = sbr.rel (0) target = $region37
  $region36: #{elman_sequence_forward.1} parent=0 // pred_region
    _
  $region37: #{elman_sequence_forward.1} parent=0 // pred_fallthru
    _
  // Predicated region
  $region38: #{elman_sequence_forward.1} parent=0 // pred_check
    _
  $region39: #{elman_sequence_forward.1} parent=0 // pred_check_branch
    %773 = sbr.rel (0) target = $region41
  $region40: #{elman_sequence_forward.1} parent=0 // pred_region
    _
  $region41: #{elman_sequence_forward.1} parent=0 // pred_fallthru
    _
  // Predicated region
  $region42: #{elman_sequence_forward.1} parent=0 // pred_check
    _
  $region43: #{elman_sequence_forward.1} parent=0 // pred_check_branch
    %775 = sbr.rel (0) target = $region45
  $region44: #{elman_sequence_forward.1} parent=0 // pred_region
    _
  $region45: #{elman_sequence_forward.1} parent=0 // pred_fallthru
    _
  // Predicated region
  $region46: #{elman_sequence_forward.1} parent=0 // pred_check
    _
  $region47: #{elman_sequence_forward.1} parent=0 // pred_check_branch
    %777 = sbr.rel (0) target = $region49
  $region48: #{elman_sequence_forward.1} parent=0 // pred_region
    _
  $region49: #{elman_sequence_forward.1} parent=0 // pred_fallthru
    _

</llo_original>
